<compile_context>
chip_gen: v5e
topology: v5e:2x2
jax: 0.10.0
libtpu: 0.0.40
codegen_flags: <defaults>
</compile_context>

<pallas_src>
import math
import functools

import jax
import jax.numpy as jnp
from jax.experimental import pallas as pl
from jax.experimental.pallas import tpu as pltpu


# ----------------------------------------------------------------------------------
# Device / generation detection (drives exp dtype, VMEM budget and tile targets).
# ----------------------------------------------------------------------------------
def _tpu_generation():
    try:
        kind = jax.devices()[0].device_kind.lower()
    except Exception:
        return None
    if "tpu" not in kind:
        return None
    for tag, gen in (("v7", 7), ("7x", 7), ("v6", 6), ("v5", 5),
                     ("v4", 4), ("v3", 3), ("v2", 2)):
        if tag in kind:
            return gen
    return None


def _softmax_exp_dtype(gen=None):
    """bf16 exp on bf16-EUP generations (v6e / v7x); f32 on v5e / older / unknown."""
    if gen is None:
        gen = _tpu_generation()
    return jnp.bfloat16 if (gen is not None and gen >= 6) else jnp.float32


# ----------------------------------------------------------------------------------
# Kernel
# ----------------------------------------------------------------------------------
def _flash_attn_kernel(*refs, has_mask, clip, exp_dtype):
    if has_mask:
        bias_ref, q_ref, k_ref, v_ref, o_ref, m_sc, l_sc, acc_sc = refs
    else:
        q_ref, k_ref, v_ref, o_ref, m_sc, l_sc, acc_sc = refs

    ki = pl.program_id(2)
    n_heads, _, head_d = acc_sc.shape

    @pl.when(ki == 0)
    def _init():
        m_sc[...] = jnp.full(m_sc.shape, -jnp.inf, dtype=jnp.float32)
        l_sc[...] = jnp.zeros(l_sc.shape, dtype=jnp.float32)
        acc_sc[...] = jnp.zeros(acc_sc.shape, dtype=jnp.float32)

    # bf16 tiles; 1/sqrt(head_depth) is already folded into Q by the wrapper.
    q = q_ref[0]                       # (H, tq, D)
    k = k_ref[0]                       # (H, tk, D)
    v = v_ref[0]                       # (H, tk, D)

    # Batched Q @ K^T contracting head_depth (no materialized transpose), f32 accum.
    s = jax.lax.dot_general(
        q, k, (((2,), (2,)), ((0,), (0,))),
        preferred_element_type=jnp.float32)                      # (H, tq, tk) f32

    if clip is not None:
        s = clip * jnp.tanh(s)

    if has_mask:
        # Additive mask bias (0 visible / -inf sentinel).  Differs from masked_fill
        # only for fully-masked rows (degenerate case).
        s = s + bias_ref[...].astype(jnp.float32)                # (1, 1, tk) broadcast

    # Online-softmax (flash) update; running state stays f32, exp runs in exp_dtype
    # (bf16 on v6e/v7x doubles throughput on the EUP, the binding unit at small D).
    m_prev = m_sc[...]                                           # (H, tq, 1)
    m_new = jnp.maximum(m_prev, jnp.max(s, axis=-1, keepdims=True))
    alpha = jnp.exp(m_prev - m_new)                              # f32
    p = jnp.exp((s - m_new).astype(exp_dtype))                   # (H, tq, tk)
    l_sc[...] = alpha * l_sc[...] + jnp.sum(
        p.astype(jnp.float32), axis=-1, keepdims=True)
    acc_sc[...] = alpha * acc_sc[...] + jax.lax.dot_general(
        p.astype(v.dtype), v, (((2,), (1,)), ((0,), (0,))),
        preferred_element_type=jnp.float32)                      # (H, tq, D)
    m_sc[...] = m_new

    @pl.when(ki == pl.num_programs(2) - 1)
    def _finalize():
        # Exact normalization (runs once per (b, qi), off the critical path).
        inv_l = pl.reciprocal(l_sc[...], approx=False)           # (H, tq, 1)
        # Store each head's normalized tile straight at its lane offset in the
        # lane-dense (tq, H*D) output slab (replaces the per-head concat epilogue).
        for h in range(n_heads):                                 # static unroll, small H
            o_ref[0, :, h * head_d:(h + 1) * head_d] = (
                acc_sc[h] * inv_l[h]).astype(o_ref.dtype)


# ----------------------------------------------------------------------------------
# Tiling / VMEM helpers
# ----------------------------------------------------------------------------------
def _round_up(x, q):
    return ((x + q - 1) // q) * q


def _pick_tile(size, target, quantum):
    """Largest tile <= target that divides `size` and is a multiple of `quantum`
    (falls back to the full extent, which is always a legal block)."""
    if size <= target:
        return size
    t = (target // quantum) * quantum
    while t >= quantum:
        if size % t == 0:
            return t
        t -= quantum
    return size


def _vmem_bytes_estimate(H, tq, tk, D, in_isz, out_isz, has_mask):
    """Padding-aware VMEM estimate (trailing dim pads to 128 lanes, 2nd-minor to 8)."""
    d_lane = _round_up(D, 128)
    tk_lane = _round_up(tk, 128)
    hd_lane = _round_up(H * D, 128)
    tq_sub = _round_up(tq, 8)
    tk_sub = _round_up(tk, 8)
    est = 2 * H * tq_sub * d_lane * in_isz           # Q block (double-buffered)
    est += 2 * 2 * H * tk_sub * d_lane * in_isz      # K + V blocks (double-buffered)
    if has_mask:
        est += 2 * 8 * tk_lane * 2                   # bias block (bf16)
    est += 2 * tq_sub * hd_lane * out_isz            # output block (double-buffered)
    est += 2 * H * tq_sub * 128 * 4                  # m, l scratch (lane-padded)
    est += H * tq_sub * d_lane * 4                   # acc scratch
    est += 2 * H * tq_sub * tk_lane * 4              # live f32 logits / probs
    return int(est * 1.15) + (4 << 20)               # Mosaic internal-scratch headroom


# ----------------------------------------------------------------------------------
# Wrapper
# ----------------------------------------------------------------------------------
def dot_product_attention(Q, K, V, mask=None, *, clip=None, head_depth=None,
                          inf=1e10, softmax_exp_dtype=None):
    """Pallas TPU DotProductAttention.forward (softmax path).

    Q: (B, H, Sq, D), K/V: (B, H, Sk, D), mask: (B, Sk, 1) bool (True == masked).
    Returns (B, H, Sq, D) in Q's dtype.  Matmuls run on bf16 MXU operands with f32
    accumulation (flash-attention-standard numerics).
    """
    # TODO(synk): return_logits=True path (raw masked logits output) not implemented.
    B, H, Sq, D = Q.shape
    Sk = K.shape[2]
    if head_depth is None:
        head_depth = D                 # avoid silent mis-scaling when D != 16
    inv_scale = 1.0 / math.sqrt(head_depth)

    gen = _tpu_generation()
    if softmax_exp_dtype is None:
        softmax_exp_dtype = _softmax_exp_dtype(gen)

    # MXU operand dtype: bf16 on all generations; fold 1/sqrt(d) into the cast so the
    # resident Q block is not rescaled every k-step inside the kernel.
    compute_dtype = jnp.bfloat16 if Q.dtype == jnp.float32 else Q.dtype
    Qc = (Q * inv_scale).astype(compute_dtype)
    Kc = K.astype(compute_dtype)
    Vc = V.astype(compute_dtype)

    has_mask = mask is not None
    if has_mask:
        bias = jnp.where(mask.reshape(B, Sk), -float(inf), 0.0)
        bias = bias.astype(jnp.bfloat16)[:, None, :]             # (B, 1, Sk)

    # ---- Generation-aware tiling & VMEM policy --------------------------------------
    if gen is not None and 4 <= gen <= 6:
        vmem_cap = 100 << 20           # 128 MiB physical; slow HBM -> larger q tiles
        tq_target, tk_target = 512, 512
    elif gen in (2, 3):
        vmem_cap = 12 << 20
        tq_target, tk_target = 128, 256
    else:                              # v7x (64 MiB physical) or unknown / interpret
        vmem_cap = 48 << 20
        tq_target, tk_target = 256, 512

    tq = _pick_tile(Sq, tq_target, 8)
    tk = _pick_tile(Sk, tk_target, 128)

    in_isz = jnp.dtype(compute_dtype).itemsize
    out_isz = jnp.dtype(Q.dtype).itemsize
    budget = int(vmem_cap * 0.85)
    for _ in range(6):                 # shrink tk, then tq, until the estimate fits
        if _vmem_bytes_estimate(H, tq, tk, D, in_isz, out_isz, has_mask) <= budget:
            break
        if tk > 128:
            new_tk = _pick_tile(Sk, max(tk // 2, 128), 128)
            if new_tk < tk:
                tk = new_tk
                continue
        if tq > 8:
            new_tq = _pick_tile(Sq, max(tq // 2, 8), 8)
            if new_tq < tq:
                tq = new_tq
                continue
        break

    # v7x megacore occupancy: ensure both TensorCores get at least one (b, qi) step.
    if gen is not None and gen >= 7 and B * (Sq // tq) < 2 and tq > 8:
        new_tq = _pick_tile(Sq, max(tq // 2, 8), 8)
        if new_tq < tq and B * (Sq // new_tq) >= 2:
            tq = new_tq

    grid = (B, Sq // tq, Sk // tk)

    kernel = functools.partial(_flash_attn_kernel, has_mask=has_mask, clip=clip,
                               exp_dtype=softmax_exp_dtype)

    in_specs = [
        pl.BlockSpec((1, H, tq, D), lambda b, qi, ki: (b, 0, qi, 0)),   # Q
        pl.BlockSpec((1, H, tk, D), lambda b, qi, ki: (b, 0, ki, 0)),   # K
        pl.BlockSpec((1, H, tk, D), lambda b, qi, ki: (b, 0, ki, 0)),   # V
    ]
    args = (Qc, Kc, Vc)
    if has_mask:
        in_specs = [pl.BlockSpec((1, 1, tk), lambda b, qi, ki: (b, 0, ki))] + in_specs
        args = (bias,) + args

    out_dense = pl.pallas_call(
        kernel,
        out_shape=jax.ShapeDtypeStruct((B, Sq, H * D), Q.dtype),
        grid_spec=pltpu.PrefetchScalarGridSpec(
            num_scalar_prefetch=0,
            grid=grid,
            in_specs=in_specs,
            out_specs=pl.BlockSpec((1, tq, H * D), lambda b, qi, ki: (b, qi, 0)),
            scratch_shapes=[
                pltpu.VMEM((H, tq, 1), jnp.float32),   # running max   m
                pltpu.VMEM((H, tq, 1), jnp.float32),   # running sum   l
                pltpu.VMEM((H, tq, D), jnp.float32),   # output accumulator
            ]),
        compiler_params=pltpu.CompilerParams(
            dimension_semantics=("parallel", "parallel", "arbitrary"),
            vmem_limit_bytes=int(vmem_cap)),
    )(*args)

    # Lane-dense (B, Sq, H*D) -> PyTorch layout (B, H, Sq, D); layout plumbing only.
    return out_dense.reshape(B, Sq, H, D).transpose(0, 2, 1, 3)


# ----------------------------------------------------------------------------------
# Reference: module math at the kernel's operand precision (bf16 operands, f32 accum,
# exp in exp_dtype).  Semantics identical to the PyTorch module's softmax path.
# ----------------------------------------------------------------------------------
def _reference(Q, K, V, mask=None, clip=None, head_depth=None, inf=1e10,
               compute_dtype=jnp.bfloat16, exp_dtype=jnp.float32):
    if head_depth is None:
        head_depth = Q.shape[-1]
    scale = math.sqrt(head_depth)
    Qr = Q.astype(compute_dtype).astype(jnp.float32)
    Kr = K.astype(compute_dtype).astype(jnp.float32)
    Vr = V.astype(compute_dtype).astype(jnp.float32)
    logits = jnp.einsum("bhqd,bhkd->bhqk", Qr, Kr, precision="highest") / scale
    if clip is not None:
        logits = clip * jnp.tanh(logits)
    if mask is not None:
        m = mask.reshape(mask.shape[0], -1)[:, None, None, :]    # (B, 1, 1, Sk)
        logits = jnp.where(m, -float(inf), logits)
    m_max = jnp.max(logits, axis=-1, keepdims=True)
    p = jnp.exp((logits - m_max).astype(exp_dtype)).astype(jnp.float32)
    p = p.astype(compute_dtype).astype(jnp.float32)              # PV operand rounding
    probs = p / jnp.sum(p, axis=-1, keepdims=True)
    return jnp.einsum("bhqk,bhkd->bhqd", probs, Vr, precision="highest")


if __name__ == "__main__":
    B, H, Sq, Sk, D = 2, 4, 8, 8, 16   # head_depth = 16 (module default)

    key = jax.random.PRNGKey(0)
    kq, kk, kv = jax.random.split(key, 3)
    Q = jax.random.normal(kq, (B, H, Sq, D), dtype=jnp.float32)
    K = jax.random.normal(kk, (B, H, Sk, D), dtype=jnp.float32)
    V = jax.random.normal(kv, (B, H, Sk, D), dtype=jnp.float32)

    # mask: (batch, n_nodes, 1) bool — mask out the last two nodes of each batch.
    mask = jnp.zeros((B, Sk, 1), dtype=bool).at[:, -2:, :].set(True)

    exp_dt = _softmax_exp_dtype()

    # f32 inputs, masked.  The kernel intentionally runs MXU matmuls on bf16 operands
    # (flash-attention numerics), so parity is checked against the module math at
    # matched operand precision; tolerances reflect bf16 rounding.
    out = jax.block_until_ready(dot_product_attention(Q, K, V, mask))
    ref = _reference(Q, K, V, mask, exp_dtype=exp_dt)
    assert out.shape == (B, H, Sq, D) and out.dtype == Q.dtype
    assert jnp.allclose(out, ref, atol=2e-2, rtol=2e-2), "f32 masked mismatch"

    # f32 inputs, clip=10, no mask (exercises the clip*tanh path that failed before).
    out_c = jax.block_until_ready(dot_product_attention(Q, K, V, None, clip=10.0))
    ref_c = _reference(Q, K, V, None, clip=10.0, exp_dtype=exp_dt)
    assert jnp.allclose(out_c, ref_c, atol=2e-2, rtol=2e-2), "f32 clip mismatch"

    # bf16 inputs, masked (output also bf16).
    Qb, Kb, Vb = (x.astype(jnp.bfloat16) for x in (Q, K, V))
    out_b = jax.block_until_ready(dot_product_attention(Qb, Kb, Vb, mask))
    ref_b = _reference(Qb, Kb, Vb, mask, exp_dtype=exp_dt)
    assert out_b.dtype == jnp.bfloat16
    assert jnp.allclose(out_b.astype(jnp.float32), ref_b, atol=5e-2, rtol=5e-2), \
        "bf16 mismatch"

    print("KERNEL_OK")
</pallas_src>

<mosaic_0001>
module attributes {stable_mosaic.version = 11 : i64} {
  func.func @_flash_attn_kernel(%arg0: i32, %arg1: i32, %arg2: i32, %arg3: memref<1x1x8xbf16, #tpu.memory_space<vmem>>, %arg4: memref<1x4x8x16xbf16, #tpu.memory_space<vmem>>, %arg5: memref<1x4x8x16xbf16, #tpu.memory_space<vmem>>, %arg6: memref<1x4x8x16xbf16, #tpu.memory_space<vmem>>, %arg7: memref<1x8x64xf32, #tpu.memory_space<vmem>>, %arg8: memref<4x8x1xf32, #tpu.memory_space<vmem>>, %arg9: memref<4x8x1xf32, #tpu.memory_space<vmem>>, %arg10: memref<4x8x16xf32, #tpu.memory_space<vmem>>) attributes {dimension_semantics = [#tpu.dimension_semantics<parallel>, #tpu.dimension_semantics<parallel>, #tpu.dimension_semantics<arbitrary>], iteration_bounds = array<i64: 2, 1, 1>, scalar_prefetch = 0 : i64, scratch_operands = 3 : i64, tpu.core_type = #tpu.core_type<tc>, window_params = [{transform_indices = @transform_0, window_bounds = array<i64: 1, 1, 8>}, {transform_indices = @transform_1, window_bounds = array<i64: 1, 4, 8, 16>}, {transform_indices = @transform_2, window_bounds = array<i64: 1, 4, 8, 16>}, {transform_indices = @transform_3, window_bounds = array<i64: 1, 4, 8, 16>}, {transform_indices = @transform_4, window_bounds = array<i64: 1, 8, 64>}]} {
    %c0_i32 = arith.constant 0 : i32
    %0 = arith.cmpi eq, %arg2, %c0_i32 : i32
    %1 = arith.extui %0 : i1 to i32
    %c0_i32_0 = arith.constant 0 : i32
    %2 = arith.cmpi ne, %1, %c0_i32_0 : i32
    scf.if %2 {
      %cst_38 = arith.constant 0xFF800000 : f32
      %40 = vector.broadcast %cst_38 : f32 to vector<4x8x1xf32>
      %c0_39 = arith.constant 0 : index
      %c0_40 = arith.constant 0 : index
      %c0_41 = arith.constant 0 : index
      %41 = vector.load %arg8[%c0_39, %c0_40, %c0_41] : memref<4x8x1xf32, #tpu.memory_space<vmem>>, vector<4x8x1xf32>
      tpu.vector_store %arg8[%c0_39, %c0_40, %c0_41], %40 {strides = array<i32>} : memref<4x8x1xf32, #tpu.memory_space<vmem>>, vector<4x8x1xf32>,
      %cst_42 = arith.constant 0.000000e+00 : f32
      %42 = vector.broadcast %cst_42 : f32 to vector<4x8x1xf32>
      %c0_43 = arith.constant 0 : index
      %c0_44 = arith.constant 0 : index
      %c0_45 = arith.constant 0 : index
      %43 = vector.load %arg9[%c0_43, %c0_44, %c0_45] : memref<4x8x1xf32, #tpu.memory_space<vmem>>, vector<4x8x1xf32>
      tpu.vector_store %arg9[%c0_43, %c0_44, %c0_45], %42 {strides = array<i32>} : memref<4x8x1xf32, #tpu.memory_space<vmem>>, vector<4x8x1xf32>,
      %cst_46 = arith.constant 0.000000e+00 : f32
      %44 = vector.broadcast %cst_46 : f32 to vector<4x8x16xf32>
      %c0_47 = arith.constant 0 : index
      %c0_48 = arith.constant 0 : index
      %c0_49 = arith.constant 0 : index
      %45 = vector.load %arg10[%c0_47, %c0_48, %c0_49] : memref<4x8x16xf32, #tpu.memory_space<vmem>>, vector<4x8x16xf32>
      tpu.vector_store %arg10[%c0_47, %c0_48, %c0_49], %44 {strides = array<i32>} : memref<4x8x16xf32, #tpu.memory_space<vmem>>, vector<4x8x16xf32>,
    } else {
    }
    %c0 = arith.constant 0 : index
    %c0_1 = arith.constant 0 : index
    %c0_2 = arith.constant 0 : index
    %c0_3 = arith.constant 0 : index
    %3 = vector.load %arg4[%c0, %c0_1, %c0_2, %c0_3] : memref<1x4x8x16xbf16, #tpu.memory_space<vmem>>, vector<1x4x8x16xbf16>
    %4 = vector.shape_cast %3 : vector<1x4x8x16xbf16> to vector<4x8x16xbf16>
    %c0_4 = arith.constant 0 : index
    %c0_5 = arith.constant 0 : index
    %c0_6 = arith.constant 0 : index
    %c0_7 = arith.constant 0 : index
    %5 = vector.load %arg5[%c0_4, %c0_5, %c0_6, %c0_7] : memref<1x4x8x16xbf16, #tpu.memory_space<vmem>>, vector<1x4x8x16xbf16>
    %6 = vector.shape_cast %5 : vector<1x4x8x16xbf16> to vector<4x8x16xbf16>
    %c0_8 = arith.constant 0 : index
    %c0_9 = arith.constant 0 : index
    %c0_10 = arith.constant 0 : index
    %c0_11 = arith.constant 0 : index
    %7 = vector.load %arg6[%c0_8, %c0_9, %c0_10, %c0_11] : memref<1x4x8x16xbf16, #tpu.memory_space<vmem>>, vector<1x4x8x16xbf16>
    %8 = vector.shape_cast %7 : vector<1x4x8x16xbf16> to vector<4x8x16xbf16>
    %cst = arith.constant dense<0.000000e+00> : vector<4x8x8xf32>
    %9 = tpu.matmul %4, %6, %cst {dimension_numbers = #tpu.dot_dimension_numbers<[2], [2], [1], [1], [0, 0, 0, 1, 1, 1], [0], [0]>} : vector<4x8x16xbf16>, vector<4x8x16xbf16>, vector<4x8x8xf32> -> vector<4x8x8xf32>
    %c0_12 = arith.constant 0 : index
    %c0_13 = arith.constant 0 : index
    %c0_14 = arith.constant 0 : index
    %10 = vector.load %arg3[%c0_12, %c0_13, %c0_14] : memref<1x1x8xbf16, #tpu.memory_space<vmem>>, vector<1x1x8xbf16>
    %11 = arith.extf %10 : vector<1x1x8xbf16> to vector<1x1x8xf32>
    %12 = vector.broadcast %11 : vector<1x1x8xf32> to vector<4x8x8xf32>
    %13 = arith.addf %9, %12 : vector<4x8x8xf32>
    %c0_15 = arith.constant 0 : index
    %c0_16 = arith.constant 0 : index
    %c0_17 = arith.constant 0 : index
    %14 = vector.load %arg8[%c0_15, %c0_16, %c0_17] : memref<4x8x1xf32, #tpu.memory_space<vmem>>, vector<4x8x1xf32>
    %cst_18 = arith.constant dense<0xFF800000> : vector<4x8xf32>
    %15 = vector.multi_reduction <maximumf>, %13, %cst_18 [2] : vector<4x8x8xf32> to vector<4x8xf32>
    %16 = vector.shape_cast %15 : vector<4x8xf32> to vector<4x8x1xf32>
    %17 = arith.maximumf %14, %16 : vector<4x8x1xf32>
    %18 = arith.subf %14, %17 : vector<4x8x1xf32>
    %19 = math.exp %18 : vector<4x8x1xf32>
    %20 = vector.broadcast %17 : vector<4x8x1xf32> to vector<4x8x8xf32>
    %21 = arith.subf %13, %20 : vector<4x8x8xf32>
    %22 = math.exp %21 : vector<4x8x8xf32>
    %c0_19 = arith.constant 0 : index
    %c0_20 = arith.constant 0 : index
    %c0_21 = arith.constant 0 : index
    %23 = vector.load %arg9[%c0_19, %c0_20, %c0_21] : memref<4x8x1xf32, #tpu.memory_space<vmem>>, vector<4x8x1xf32>
    %24 = arith.mulf %19, %23 : vector<4x8x1xf32>
    %cst_22 = arith.constant dense<0.000000e+00> : vector<4x8xf32>
    %25 = vector.multi_reduction <add>, %22, %cst_22 [2] : vector<4x8x8xf32> to vector<4x8xf32>
    %26 = vector.shape_cast %25 : vector<4x8xf32> to vector<4x8x1xf32>
    %27 = arith.addf %24, %26 : vector<4x8x1xf32>
    %c0_23 = arith.constant 0 : index
    %c0_24 = arith.constant 0 : index
    %c0_25 = arith.constant 0 : index
    %28 = vector.load %arg9[%c0_23, %c0_24, %c0_25] : memref<4x8x1xf32, #tpu.memory_space<vmem>>, vector<4x8x1xf32>
    tpu.vector_store %arg9[%c0_23, %c0_24, %c0_25], %27 {strides = array<i32>} : memref<4x8x1xf32, #tpu.memory_space<vmem>>, vector<4x8x1xf32>,
    %c0_26 = arith.constant 0 : index
    %c0_27 = arith.constant 0 : index
    %c0_28 = arith.constant 0 : index
    %29 = vector.load %arg10[%c0_26, %c0_27, %c0_28] : memref<4x8x16xf32, #tpu.memory_space<vmem>>, vector<4x8x16xf32>
    %30 = vector.broadcast %19 : vector<4x8x1xf32> to vector<4x8x16xf32>
    %31 = arith.mulf %30, %29 : vector<4x8x16xf32>
    %32 = arith.truncf %22 : vector<4x8x8xf32> to vector<4x8x8xbf16>
    %cst_29 = arith.constant dense<0.000000e+00> : vector<4x8x16xf32>
    %33 = tpu.matmul %32, %8, %cst_29 {dimension_numbers = #tpu.dot_dimension_numbers<[2], [1], [1], [2], [0, 0, 0, 1, 1, 2], [0], [0]>} : vector<4x8x8xbf16>, vector<4x8x16xbf16>, vector<4x8x16xf32> -> vector<4x8x16xf32>
    %34 = arith.addf %31, %33 : vector<4x8x16xf32>
    %c0_30 = arith.constant 0 : index
    %c0_31 = arith.constant 0 : index
    %c0_32 = arith.constant 0 : index
    %35 = vector.load %arg10[%c0_30, %c0_31, %c0_32] : memref<4x8x16xf32, #tpu.memory_space<vmem>>, vector<4x8x16xf32>
    tpu.vector_store %arg10[%c0_30, %c0_31, %c0_32], %34 {strides = array<i32>} : memref<4x8x16xf32, #tpu.memory_space<vmem>>, vector<4x8x16xf32>,
    %c0_33 = arith.constant 0 : index
    %c0_34 = arith.constant 0 : index
    %c0_35 = arith.constant 0 : index
    %36 = vector.load %arg8[%c0_33, %c0_34, %c0_35] : memref<4x8x1xf32, #tpu.memory_space<vmem>>, vector<4x8x1xf32>
    tpu.vector_store %arg8[%c0_33, %c0_34, %c0_35], %17 {strides = array<i32>} : memref<4x8x1xf32, #tpu.memory_space<vmem>>, vector<4x8x1xf32>,
    %c0_i32_36 = arith.constant 0 : i32
    %37 = arith.cmpi eq, %arg2, %c0_i32_36 : i32
    %38 = arith.extui %37 : i1 to i32
    %c0_i32_37 = arith.constant 0 : i32
    %39 = arith.cmpi ne, %38, %c0_i32_37 : i32
    scf.if %39 {
      %c0_38 = arith.constant 0 : index
      %c0_39 = arith.constant 0 : index
      %c0_40 = arith.constant 0 : index
      %40 = vector.load %arg9[%c0_38, %c0_39, %c0_40] : memref<4x8x1xf32, #tpu.memory_space<vmem>>, vector<4x8x1xf32>
      %41 = tpu.reciprocal %40 : vector<4x8x1xf32> -> vector<4x8x1xf32>
      %c0_41 = arith.constant 0 : index
      %c0_42 = arith.constant 0 : index
      %c0_43 = arith.constant 0 : index
      %42 = vector.load %arg10[%c0_41, %c0_42, %c0_43] : memref<4x8x16xf32, #tpu.memory_space<vmem>>, vector<1x8x16xf32>
      %43 = vector.shape_cast %42 : vector<1x8x16xf32> to vector<8x16xf32>
      %44 = vector.extract_strided_slice %41 {offsets = [0, 0, 0], sizes = [1, 8, 1], strides = [1, 1, 1]} : vector<4x8x1xf32> to vector<1x8x1xf32>
      %45 = vector.shape_cast %44 : vector<1x8x1xf32> to vector<8x1xf32>
      %46 = vector.broadcast %45 : vector<8x1xf32> to vector<8x16xf32>
      %47 = arith.mulf %43, %46 : vector<8x16xf32>
      %c0_44 = arith.constant 0 : index
      %c0_45 = arith.constant 0 : index
      %c0_46 = arith.constant 0 : index
      %48 = vector.load %arg7[%c0_44, %c0_45, %c0_46] : memref<1x8x64xf32, #tpu.memory_space<vmem>>, vector<1x8x16xf32>
      %49 = vector.shape_cast %48 : vector<1x8x16xf32> to vector<8x16xf32>
      %50 = vector.shape_cast %47 : vector<8x16xf32> to vector<1x8x16xf32>
      tpu.vector_store %arg7[%c0_44, %c0_45, %c0_46], %50 {strides = array<i32>} : memref<1x8x64xf32, #tpu.memory_space<vmem>>, vector<1x8x16xf32>,
      %c1 = arith.constant 1 : index
      %c0_47 = arith.constant 0 : index
      %c0_48 = arith.constant 0 : index
      %51 = vector.load %arg10[%c1, %c0_47, %c0_48] : memref<4x8x16xf32, #tpu.memory_space<vmem>>, vector<1x8x16xf32>
      %52 = vector.shape_cast %51 : vector<1x8x16xf32> to vector<8x16xf32>
      %53 = vector.extract_strided_slice %41 {offsets = [1, 0, 0], sizes = [1, 8, 1], strides = [1, 1, 1]} : vector<4x8x1xf32> to vector<1x8x1xf32>
      %54 = vector.shape_cast %53 : vector<1x8x1xf32> to vector<8x1xf32>
      %55 = vector.broadcast %54 : vector<8x1xf32> to vector<8x16xf32>
      %56 = arith.mulf %52, %55 : vector<8x16xf32>
      %c0_49 = arith.constant 0 : index
      %c0_50 = arith.constant 0 : index
      %c16 = arith.constant 16 : index
      %57 = vector.load %arg7[%c0_49, %c0_50, %c16] : memref<1x8x64xf32, #tpu.memory_space<vmem>>, vector<1x8x16xf32>
      %58 = vector.shape_cast %57 : vector<1x8x16xf32> to vector<8x16xf32>
      %59 = vector.shape_cast %56 : vector<8x16xf32> to vector<1x8x16xf32>
      tpu.vector_store %arg7[%c0_49, %c0_50, %c16], %59 {strides = array<i32>} : memref<1x8x64xf32, #tpu.memory_space<vmem>>, vector<1x8x16xf32>,
      %c2 = arith.constant 2 : index
      %c0_51 = arith.constant 0 : index
      %c0_52 = arith.constant 0 : index
      %60 = vector.load %arg10[%c2, %c0_51, %c0_52] : memref<4x8x16xf32, #tpu.memory_space<vmem>>, vector<1x8x16xf32>
      %61 = vector.shape_cast %60 : vector<1x8x16xf32> to vector<8x16xf32>
      %62 = vector.extract_strided_slice %41 {offsets = [2, 0, 0], sizes = [1, 8, 1], strides = [1, 1, 1]} : vector<4x8x1xf32> to vector<1x8x1xf32>
      %63 = vector.shape_cast %62 : vector<1x8x1xf32> to vector<8x1xf32>
      %64 = vector.broadcast %63 : vector<8x1xf32> to vector<8x16xf32>
      %65 = arith.mulf %61, %64 : vector<8x16xf32>
      %c0_53 = arith.constant 0 : index
      %c0_54 = arith.constant 0 : index
      %c32 = arith.constant 32 : index
      %66 = vector.load %arg7[%c0_53, %c0_54, %c32] : memref<1x8x64xf32, #tpu.memory_space<vmem>>, vector<1x8x16xf32>
      %67 = vector.shape_cast %66 : vector<1x8x16xf32> to vector<8x16xf32>
      %68 = vector.shape_cast %65 : vector<8x16xf32> to vector<1x8x16xf32>
      tpu.vector_store %arg7[%c0_53, %c0_54, %c32], %68 {strides = array<i32>} : memref<1x8x64xf32, #tpu.memory_space<vmem>>, vector<1x8x16xf32>,
      %c3 = arith.constant 3 : index
      %c0_55 = arith.constant 0 : index
      %c0_56 = arith.constant 0 : index
      %69 = vector.load %arg10[%c3, %c0_55, %c0_56] : memref<4x8x16xf32, #tpu.memory_space<vmem>>, vector<1x8x16xf32>
      %70 = vector.shape_cast %69 : vector<1x8x16xf32> to vector<8x16xf32>
      %71 = vector.extract_strided_slice %41 {offsets = [3, 0, 0], sizes = [1, 8, 1], strides = [1, 1, 1]} : vector<4x8x1xf32> to vector<1x8x1xf32>
      %72 = vector.shape_cast %71 : vector<1x8x1xf32> to vector<8x1xf32>
      %73 = vector.broadcast %72 : vector<8x1xf32> to vector<8x16xf32>
      %74 = arith.mulf %70, %73 : vector<8x16xf32>
      %c0_57 = arith.constant 0 : index
      %c0_58 = arith.constant 0 : index
      %c48 = arith.constant 48 : index
      %75 = vector.load %arg7[%c0_57, %c0_58, %c48] : memref<1x8x64xf32, #tpu.memory_space<vmem>>, vector<1x8x16xf32>
      %76 = vector.shape_cast %75 : vector<1x8x16xf32> to vector<8x16xf32>
      %77 = vector.shape_cast %74 : vector<8x16xf32> to vector<1x8x16xf32>
      tpu.vector_store %arg7[%c0_57, %c0_58, %c48], %77 {strides = array<i32>} : memref<1x8x64xf32, #tpu.memory_space<vmem>>, vector<1x8x16xf32>,
    } else {
    }
    return
  }
  func.func @transform_0(%arg0: i32, %arg1: i32, %arg2: i32) -> (i32, i32, i32) {
    %c0_i32 = arith.constant 0 : i32
    %c0_i32_0 = arith.constant 0 : i32
    return %arg0, %c0_i32, %arg2 : i32, i32, i32
  }
  func.func @transform_1(%arg0: i32, %arg1: i32, %arg2: i32) -> (i32, i32, i32, i32) {
    %c0_i32 = arith.constant 0 : i32
    %c0_i32_0 = arith.constant 0 : i32
    %c0_i32_1 = arith.constant 0 : i32
    return %arg0, %c0_i32, %arg1, %c0_i32_0 : i32, i32, i32, i32
  }
  func.func @transform_2(%arg0: i32, %arg1: i32, %arg2: i32) -> (i32, i32, i32, i32) {
    %c0_i32 = arith.constant 0 : i32
    %c0_i32_0 = arith.constant 0 : i32
    %c0_i32_1 = arith.constant 0 : i32
    return %arg0, %c0_i32, %arg2, %c0_i32_0 : i32, i32, i32, i32
  }
  func.func @transform_3(%arg0: i32, %arg1: i32, %arg2: i32) -> (i32, i32, i32, i32) {
    %c0_i32 = arith.constant 0 : i32
    %c0_i32_0 = arith.constant 0 : i32
    %c0_i32_1 = arith.constant 0 : i32
    return %arg0, %c0_i32, %arg2, %c0_i32_0 : i32, i32, i32, i32
  }
  func.func @transform_4(%arg0: i32, %arg1: i32, %arg2: i32) -> (i32, i32, i32) {
    %c0_i32 = arith.constant 0 : i32
    %c0_i32_0 = arith.constant 0 : i32
    return %arg0, %arg1, %c0_i32 : i32, i32, i32
  }
}

</mosaic_0001>

<llo_original>
// kernel: tpu_custom_call.1
$region0: #{tpu_custom_call.1}
  #allocation0 [shape = 'u32[]', space=smem, size = 0x4, offset = 0x4, fixed_abs, tag = 'smem constant byte address 0x4 - core index']
  #allocation1 [shape = 'u32[72,128]{1,0:T(1,128)}', space=vmem, size = 0x9000, scoped, tag = 'internal scratch']
  #allocation2 [shape = 'f32[4,8,1]{2,1,0:T(8,128)}', space=vmem, size = 0x4000, scoped, tag = 'scratch operand']
  #allocation3 [shape = 'f32[4,8,1]{2,1,0:T(8,128)}', space=vmem, size = 0x4000, scoped, tag = 'scratch operand']
  #allocation4 [shape = 'f32[4,8,16]{2,1,0:T(8,128)}', space=vmem, size = 0x4000, scoped, tag = 'scratch operand']
  %s0 = inlined_call_operand.vmem [shape: bf16[2,1,8], index: 0, kind: input, shape index: {}]
  %s1 = inlined_call_operand.hbm [shape: bf16[2,4,8,16], index: 1, kind: input, shape index: {}]
  %s2 = inlined_call_operand.hbm [shape: bf16[2,4,8,16], index: 2, kind: input, shape index: {}]
  %s3 = inlined_call_operand.hbm [shape: bf16[2,4,8,16], index: 3, kind: input, shape index: {}]
  %s4 = inlined_call_operand.hbm [shape: f32[2,8,64], index: 4, kind: output, shape index: {}]
  %s5 = sld [smem:[#allocation0]]
  $region69: #{tpu_custom_call.1} parent=0
    _
  %s7 = ssub.s32 1, %s5
  %s8 = scalar_select 0, %s7, %s5
  $region1: #{tpu_custom_call.1} parent=0
    #allocation5 [shape = 'u8[16384]{0}', space=vmem, size = 0x4000, scoped, tag = 'input window, operand 1']
    #allocation6 [shape = 's32[2]{0}', space=sflag, size = 0x8, scoped, tag = 'scoped memory for tpu_custom_call.1']
    #allocation7 [shape = 's32[2]{0}', space=sflag, size = 0x8, scoped, tag = 'scoped memory for tpu_custom_call.1']
    #allocation8 [shape = 'u8[16384]{0}', space=vmem, size = 0x4000, scoped, tag = 'input window, operand 2']
    #allocation9 [shape = 's32[2]{0}', space=sflag, size = 0x8, scoped, tag = 'scoped memory for tpu_custom_call.1']
    #allocation10 [shape = 'u8[16384]{0}', space=vmem, size = 0x4000, scoped, tag = 'input window, operand 3']
    #allocation11 [shape = 'u8[8192]{0}', space=vmem, size = 0x2000, scoped, tag = 'output window, operand 0']
    %9 = vsyncpa [#allocation6], 0
    %s10 = scalar_lea.sflag [#allocation6], 1
    %11 = vsyncpa %s10, 0
    %12 = vsyncpa [#allocation9], 0
    %s13 = scalar_lea.sflag [#allocation9], 1
    %14 = vsyncpa %s13, 0
    %15 = vsyncpa [#allocation7], 0
    %s16 = scalar_lea.sflag [#allocation7], 1
    %17 = vsyncpa %s16, 0
    loop: start=0, step=1, limit=4
    $region2: #{tpu_custom_call.1} parent=1 // loop_pre_header
      _
    $region3: #{tpu_custom_call.1} parent=1 // loop_header
      %s19 = sphi 0, %s23
      %p20 = scmp.ge.s32.totalorder %s19, 4
      %s26 = sphi 0, %s45
      %s27 = sphi 0, %s41
      %s28 = sphi 0, %s37
      %s29 = sphi 0, %s26
      %s30 = sphi 0, %s27
      %s31 = sphi 0, %s28
      %s32 = sphi 0, %s29
      %s33 = sphi 0, %s30
      %s34 = sphi 0, %s31
      %s50 = sphi 0, %s52
      %s53 = sphi 0, %s50
      %s54 = sphi 0, %s53
      %s70 = sphi 0, %s54
      %s78 = sphi 0, %s80
      %s81 = sphi 0, %s78
      %s82 = sphi 0, %s81
      %s98 = sphi 0, %s82
      %s106 = sphi 0, %s108
      %s109 = sphi 0, %s106
      %s110 = sphi 0, %s109
      %s126 = sphi 0, %s110
      %s134 = sphi 0, %s136
      %s137 = sphi 0, %s134
      %s138 = sphi 0, %s137
      %s154 = sphi 0, %s138
      %s162 = sphi 0, %s164
      %s165 = sphi 0, %s162
      %s166 = sphi 0, %s165
      %s182 = sphi 0, %s166
    $region4: #{tpu_custom_call.1} parent=1 // loop_header_branch
      %22 = sbr.rel (%p20) target = $region8
    $region5: #{tpu_custom_call.1} parent=1 // loop_body
      %s24 = ssub.s32 %s19, 1
      %s25 = ssub.s32 %s19, 2
      %s35 = sadd.s32 1, %s28
      %p36 = scmp.ge.s32.totalorder %s35, 1
      %s37 = scalar_select %p36, 0, %s35
      %s38 = sadd.s32 1, %s27
      %s39 = scalar_select %p36, %s38, %s27
      %p40 = scmp.ge.s32.totalorder %s39, 1
      %s41 = scalar_select %p40, 0, %s39
      %s42 = sadd.s32 1, %s26
      %s43 = scalar_select %p40, %s42, %s26
      %p44 = scmp.ge.s32.totalorder %s43, 2
      %s45 = scalar_select %p44, 0, %s43
      %s46 = ssub.s32 %s26, %s45
      %s47 = ssub.s32 %s28, %s37
      %s48 = sor.u32 %s46, %s47
      %p49 = scmp.eq.s32.totalorder %s48, 0
      %s51 = sadd.s32 %s50, 1
      %s52 = scalar_select %p49, %s50, %s51
      %p55 = pneg %p49
      %p56 = scmp.eq.s32.totalorder %s19, 1
      %p57 = por %p55, %p56
      %p58 = scmp.ne.s32.totalorder %s50, %s53
      %p59 = scmp.eq.s32.totalorder %s19, 0
      %p60 = por %p58, %p59
      %p61 = scmp.ne.s32.totalorder %s50, %s53
      %p62 = scmp.eq.s32.totalorder %s24, 1
      %p63 = por %p61, %p62
      %p64 = scmp.ne.s32.totalorder %s53, %s54
      %p65 = scmp.eq.s32.totalorder %s24, 0
      %p66 = por %p64, %p65
      %p67 = scmp.ne.s32.totalorder %s53, %s54
      %p68 = scmp.eq.s32.totalorder %s25, 1
      %p69 = por %p67, %p68
      %p71 = scmp.ne.s32.totalorder %s54, %s70
      %p72 = scmp.eq.s32.totalorder %s25, 0
      %p73 = por %p71, %p72
      %s74 = ssub.s32 %s26, %s45
      %s75 = ssub.s32 %s27, %s41
      %s76 = sor.u32 %s74, %s75
      %p77 = scmp.eq.s32.totalorder %s76, 0
      %s79 = sadd.s32 %s78, 1
      %s80 = scalar_select %p77, %s78, %s79
      %p83 = pneg %p77
      %p84 = scmp.eq.s32.totalorder %s19, 1
      %p85 = por %p83, %p84
      %p86 = scmp.ne.s32.totalorder %s78, %s81
      %p87 = scmp.eq.s32.totalorder %s19, 0
      %p88 = por %p86, %p87
      %p89 = scmp.ne.s32.totalorder %s78, %s81
      %p90 = scmp.eq.s32.totalorder %s24, 1
      %p91 = por %p89, %p90
      %p92 = scmp.ne.s32.totalorder %s81, %s82
      %p93 = scmp.eq.s32.totalorder %s24, 0
      %p94 = por %p92, %p93
      %p95 = scmp.ne.s32.totalorder %s81, %s82
      %p96 = scmp.eq.s32.totalorder %s25, 1
      %p97 = por %p95, %p96
      %p99 = scmp.ne.s32.totalorder %s82, %s98
      %p100 = scmp.eq.s32.totalorder %s25, 0
      %p101 = por %p99, %p100
      %s102 = ssub.s32 %s26, %s45
      %s103 = ssub.s32 %s28, %s37
      %s104 = sor.u32 %s102, %s103
      %p105 = scmp.eq.s32.totalorder %s104, 0
      %s107 = sadd.s32 %s106, 1
      %s108 = scalar_select %p105, %s106, %s107
      %p111 = pneg %p105
      %p112 = scmp.eq.s32.totalorder %s19, 1
      %p113 = por %p111, %p112
      %p114 = scmp.ne.s32.totalorder %s106, %s109
      %p115 = scmp.eq.s32.totalorder %s19, 0
      %p116 = por %p114, %p115
      %p117 = scmp.ne.s32.totalorder %s106, %s109
      %p118 = scmp.eq.s32.totalorder %s24, 1
      %p119 = por %p117, %p118
      %p120 = scmp.ne.s32.totalorder %s109, %s110
      %p121 = scmp.eq.s32.totalorder %s24, 0
      %p122 = por %p120, %p121
      %p123 = scmp.ne.s32.totalorder %s109, %s110
      %p124 = scmp.eq.s32.totalorder %s25, 1
      %p125 = por %p123, %p124
      %p127 = scmp.ne.s32.totalorder %s110, %s126
      %p128 = scmp.eq.s32.totalorder %s25, 0
      %p129 = por %p127, %p128
      %s130 = ssub.s32 %s26, %s45
      %s131 = ssub.s32 %s28, %s37
      %s132 = sor.u32 %s130, %s131
      %p133 = scmp.eq.s32.totalorder %s132, 0
      %s135 = sadd.s32 %s134, 1
      %s136 = scalar_select %p133, %s134, %s135
      %p139 = pneg %p133
      %p140 = scmp.eq.s32.totalorder %s19, 1
      %p141 = por %p139, %p140
      %p142 = scmp.ne.s32.totalorder %s134, %s137
      %p143 = scmp.eq.s32.totalorder %s19, 0
      %p144 = por %p142, %p143
      %p145 = scmp.ne.s32.totalorder %s134, %s137
      %p146 = scmp.eq.s32.totalorder %s24, 1
      %p147 = por %p145, %p146
      %p148 = scmp.ne.s32.totalorder %s137, %s138
      %p149 = scmp.eq.s32.totalorder %s24, 0
      %p150 = por %p148, %p149
      %p151 = scmp.ne.s32.totalorder %s137, %s138
      %p152 = scmp.eq.s32.totalorder %s25, 1
      %p153 = por %p151, %p152
      %p155 = scmp.ne.s32.totalorder %s138, %s154
      %p156 = scmp.eq.s32.totalorder %s25, 0
      %p157 = por %p155, %p156
      %s158 = ssub.s32 %s26, %s45
      %s159 = ssub.s32 %s27, %s41
      %s160 = sor.u32 %s158, %s159
      %p161 = scmp.eq.s32.totalorder %s160, 0
      %s163 = sadd.s32 %s162, 1
      %s164 = scalar_select %p161, %s162, %s163
      %p167 = pneg %p161
      %p168 = scmp.eq.s32.totalorder %s19, 1
      %p169 = por %p167, %p168
      %p170 = scmp.ne.s32.totalorder %s162, %s165
      %p171 = scmp.eq.s32.totalorder %s19, 0
      %p172 = por %p170, %p171
      %p173 = scmp.ne.s32.totalorder %s162, %s165
      %p174 = scmp.eq.s32.totalorder %s24, 1
      %p175 = por %p173, %p174
      %p176 = scmp.ne.s32.totalorder %s165, %s166
      %p177 = scmp.eq.s32.totalorder %s24, 0
      %p178 = por %p176, %p177
      %p179 = scmp.ne.s32.totalorder %s165, %s166
      %p180 = scmp.eq.s32.totalorder %s25, 1
      %p181 = por %p179, %p180
      %p183 = scmp.ne.s32.totalorder %s166, %s182
      %p184 = scmp.eq.s32.totalorder %s25, 0
      %p185 = por %p183, %p184
      %p186 = scmp.le.s32.totalorder 1, %s19
      %p187 = scmp.lt.s32.totalorder %s19, 3
      %p188 = pnand %p186, %p187
      %p189 = pneg %p188
      // Predicated region
      $region9: #{tpu_custom_call.1} parent=5 // pred_check
        _
      $region10: #{tpu_custom_call.1} parent=5 // pred_check_branch
        %191 = sbr.rel (%p188) target = $region12
      $region11: #{tpu_custom_call.1} parent=5 // pred_region
        %s192 = ssub.s32 %s19, 1
      $region12: #{tpu_custom_call.1} parent=5 // pred_fallthru
        _
      %p193 = scmp.lt.s32.totalorder %s19, 2
      // Predicated region
      $region13: #{tpu_custom_call.1} parent=5 // pred_check
        %p194 = pneg %p193
      $region14: #{tpu_custom_call.1} parent=5 // pred_check_branch
        %196 = sbr.rel (%p194) target = $region16
      $region15: #{tpu_custom_call.1} parent=5 // pred_region
        // Predicated region
        $region17: #{tpu_custom_call.1} parent=15 // pred_check
          %p197 = pneg %p60
        $region18: #{tpu_custom_call.1} parent=15 // pred_check_branch
          %199 = sbr.rel (%p197) target = $region20
        $region19: #{tpu_custom_call.1} parent=15 // pred_region
          %p200 = scmp.lt.s32.totalorder %s26, 1
          %s201 = scalar_select %p200, %s26, 1
          %p202 = scmp.lt.s32.totalorder %s28, 0
          %s203 = scalar_select %p202, %s28, 0
          %s204 = sadd.s32 %s203, %s201
          %s205 = scalar_lea.vmem %s0, %s204
        $region20: #{tpu_custom_call.1} parent=15 // pred_fallthru
          _
        // Predicated region
        $region21: #{tpu_custom_call.1} parent=15 // pred_check
          %p206 = pneg %p88
        $region22: #{tpu_custom_call.1} parent=15 // pred_check_branch
          %208 = sbr.rel (%p206) target = $region24
        $region23: #{tpu_custom_call.1} parent=15 // pred_region
          %s209 = sand.u32 %s78, 1
          %s210 = scalar_lea.sflag [#allocation6], %s209
          %s211 = sand.u32 %s78, 1
          %s212 = smul.addr %s211, 16
          %s213 = scalar_lea.vmem [#allocation5], %s212
          %215 = vsyncadd %s210, 0
          %s216 = smul.addr %s26, 4
          %s217 = sadd.s32 %s27, %s216
          %s218 = smul.addr %s217, 4
          %s219 = scalar_lea.hbm %s1, %s218
          %s220 = sshll.u32 %s219, 4
          %s221 = int_to_ptr.hbm [resolvable:$true] %s220
          %s222 = sshll.u32 %s213, 4
          %s223 = int_to_ptr.vmem [resolvable:$true] %s222
          %228 = dma.hbm_to_vmem [thread:$0]  %s221, 256, %s223, %s210, 64, 64, 4
        $region24: #{tpu_custom_call.1} parent=15 // pred_fallthru
          _
        // Predicated region
        $region25: #{tpu_custom_call.1} parent=15 // pred_check
          %p229 = pneg %p116
        $region26: #{tpu_custom_call.1} parent=15 // pred_check_branch
          %231 = sbr.rel (%p229) target = $region28
        $region27: #{tpu_custom_call.1} parent=15 // pred_region
          %s232 = sand.u32 %s19, 1
          %s233 = scalar_lea.sflag [#allocation9], %s232
          %s234 = sand.u32 %s106, 1
          %s235 = smul.addr %s234, 16
          %s236 = scalar_lea.vmem [#allocation8], %s235
          %238 = vsyncadd %s233, 0
          %s239 = smul.addr %s26, 4
          %s240 = sadd.s32 %s28, %s239
          %s241 = smul.addr %s240, 4
          %s242 = scalar_lea.hbm %s2, %s241
          %s243 = sshll.u32 %s242, 4
          %s244 = int_to_ptr.hbm [resolvable:$true] %s243
          %s245 = sshll.u32 %s236, 4
          %s246 = int_to_ptr.vmem [resolvable:$true] %s245
          %251 = dma.hbm_to_vmem [thread:$0]  %s244, 256, %s246, %s233, 64, 64, 4
        $region28: #{tpu_custom_call.1} parent=15 // pred_fallthru
          _
        // Predicated region
        $region29: #{tpu_custom_call.1} parent=15 // pred_check
          %p252 = pneg %p144
        $region30: #{tpu_custom_call.1} parent=15 // pred_check_branch
          %254 = sbr.rel (%p252) target = $region32
        $region31: #{tpu_custom_call.1} parent=15 // pred_region
          %s255 = sand.u32 %s19, 1
          %s256 = scalar_lea.sflag [#allocation9], %s255
          %s257 = sand.u32 %s134, 1
          %s258 = smul.addr %s257, 16
          %s259 = scalar_lea.vmem [#allocation10], %s258
          %261 = vsyncadd %s256, 0
          %s262 = smul.addr %s26, 4
          %s263 = sadd.s32 %s28, %s262
          %s264 = smul.addr %s263, 4
          %s265 = scalar_lea.hbm %s3, %s264
          %s266 = sshll.u32 %s265, 4
          %s267 = int_to_ptr.hbm [resolvable:$true] %s266
          %s268 = sshll.u32 %s259, 4
          %s269 = int_to_ptr.vmem [resolvable:$true] %s268
          %274 = dma.hbm_to_vmem [thread:$0]  %s267, 256, %s269, %s256, 64, 64, 4
        $region32: #{tpu_custom_call.1} parent=15 // pred_fallthru
          _
      $region16: #{tpu_custom_call.1} parent=5 // pred_fallthru
        _
      %p275 = scmp.le.s32.totalorder 1, %s19
      %p276 = scmp.lt.s32.totalorder %s19, 3
      %p277 = pnand %p275, %p276
      %p278 = pneg %p277
      // Predicated region
      $region33: #{tpu_custom_call.1} parent=5 // pred_check
        _
      $region34: #{tpu_custom_call.1} parent=5 // pred_check_branch
        %280 = sbr.rel (%p277) target = $region36
      $region35: #{tpu_custom_call.1} parent=5 // pred_region
        %s281 = ssub.s32 %s19, 1
        %s282 = sand.u32 %s81, 1
        %s283 = scalar_lea.sflag [#allocation6], %s282
        %s284 = sand.u32 %s81, 1
        %s285 = smul.addr %s284, 16
        %s286 = scalar_lea.vmem [#allocation5], %s285
        // Predicated region
        $region37: #{tpu_custom_call.1} parent=35 // pred_check
          %p287 = pneg %p94
        $region38: #{tpu_custom_call.1} parent=35 // pred_check_branch
          %289 = sbr.rel (%p287) target = $region40
        $region39: #{tpu_custom_call.1} parent=35 // pred_region
          %291 = dma.done %s283, 256
        $region40: #{tpu_custom_call.1} parent=35 // pred_fallthru
          _
        %s292 = sand.u32 %s24, 1
        %s293 = scalar_lea.sflag [#allocation9], %s292
        %s294 = sand.u32 %s109, 1
        %s295 = smul.addr %s294, 16
        %s296 = scalar_lea.vmem [#allocation8], %s295
        // Predicated region
        $region41: #{tpu_custom_call.1} parent=35 // pred_check
          %p297 = pneg %p122
        $region42: #{tpu_custom_call.1} parent=35 // pred_check_branch
          %299 = sbr.rel (%p297) target = $region44
        $region43: #{tpu_custom_call.1} parent=35 // pred_region
          %301 = dma.done %s293, 256
        $region44: #{tpu_custom_call.1} parent=35 // pred_fallthru
          _
        %s302 = sand.u32 %s24, 1
        %s303 = scalar_lea.sflag [#allocation9], %s302
        %s304 = sand.u32 %s137, 1
        %s305 = smul.addr %s304, 16
        %s306 = scalar_lea.vmem [#allocation10], %s305
        // Predicated region
        $region45: #{tpu_custom_call.1} parent=35 // pred_check
          %p307 = pneg %p150
        $region46: #{tpu_custom_call.1} parent=35 // pred_check_branch
          %309 = sbr.rel (%p307) target = $region48
        $region47: #{tpu_custom_call.1} parent=35 // pred_region
          %311 = dma.done %s303, 256
        $region48: #{tpu_custom_call.1} parent=35 // pred_fallthru
          _
        %p312 = scmp.lt.s32.totalorder %s29, 1
        %s313 = scalar_select %p312, %s29, 1
        %p314 = scmp.lt.s32.totalorder %s31, 0
        %s315 = scalar_select %p314, %s31, 0
        %s316 = sadd.s32 %s315, %s313
        %s317 = scalar_lea.vmem %s0, %s316
        %p318 = pneg %p66
        %p319 = pneg %p63
        %s320 = sand.u32 %s81, 1
        %s321 = scalar_lea.sflag [#allocation6], %s320
        %s322 = sand.u32 %s81, 1
        %s323 = smul.addr %s322, 16
        %s324 = scalar_lea.vmem [#allocation5], %s323
        %p325 = pneg %p94
        %p326 = pneg %p91
        %s327 = sand.u32 %s24, 1
        %s328 = scalar_lea.sflag [#allocation9], %s327
        %s329 = sand.u32 %s109, 1
        %s330 = smul.addr %s329, 16
        %s331 = scalar_lea.vmem [#allocation8], %s330
        %p332 = pneg %p122
        %p333 = pneg %p119
        %s334 = sand.u32 %s24, 1
        %s335 = scalar_lea.sflag [#allocation9], %s334
        %s336 = sand.u32 %s137, 1
        %s337 = smul.addr %s336, 16
        %s338 = scalar_lea.vmem [#allocation10], %s337
        %p339 = pneg %p150
        %p340 = pneg %p147
        %p341 = pneg %p178
        %p342 = pneg %p175
        %s343 = sand.u32 %s165, 1
        %s344 = scalar_lea.sflag [#allocation7], %s343
        %s345 = sand.u32 %s165, 1
        %s346 = smul.addr %s345, 8
        %s347 = scalar_lea.vmem [#allocation11], %s346
        %p348 = scmp.lt.s32.totalorder %s29, 1
        %s349 = scalar_select %p348, %s29, 1
        %p350 = scmp.lt.s32.totalorder %s31, 0
        %s351 = scalar_select %p350, %s31, 0
        %s352 = sadd.s32 %s351, %s349
        %s353 = scalar_lea.vmem %s0, %s352
        %p355 = scmp.eq.s32.totalorder %s31, 0
        // Predicated region
        $region49: #{tpu_custom_call.1} parent=35 // pred_check
          %p356 = pneg %p355
        $region50: #{tpu_custom_call.1} parent=35 // pred_check_branch
          %358 = sbr.rel (%p356) target = $region52
        $region51: #{tpu_custom_call.1} parent=35 // pred_region
          %vm359 = vcmask 7168
          %360 = vst.msk [vmem:[#allocation2] sm:$0xff] %vm359, -inf
          %361 = vst.msk [vmem:[#allocation2 + $0x8] sm:$0xff] %vm359, -inf
          %362 = vst.msk [vmem:[#allocation2 + $0x10] sm:$0xff] %vm359, -inf
          %363 = vst.msk [vmem:[#allocation2 + $0x18] sm:$0xff] %vm359, -inf
          %364 = vst.msk [vmem:[#allocation3] sm:$0xff] %vm359, 0.0
          %365 = vst.msk [vmem:[#allocation3 + $0x8] sm:$0xff] %vm359, 0.0
          %366 = vst.msk [vmem:[#allocation3 + $0x10] sm:$0xff] %vm359, 0.0
          %367 = vst.msk [vmem:[#allocation3 + $0x18] sm:$0xff] %vm359, 0.0
          %vm368 = vcmask 130048
          %369 = vst.msk [vmem:[#allocation4] sm:$0xff] %vm368, 0.0
          %370 = vst.msk [vmem:[#allocation4 + $0x8] sm:$0xff] %vm368, 0.0
          %371 = vst.msk [vmem:[#allocation4 + $0x10] sm:$0xff] %vm368, 0.0
          %372 = vst.msk [vmem:[#allocation4 + $0x18] sm:$0xff] %vm368, 0.0
        $region52: #{tpu_custom_call.1} parent=35 // pred_fallthru
          _
        %v373 = vld [vmem:[%s286] sm:$0xf]
        %v374 = vld [vmem:[%s286 + $0x4] sm:$0xf]
        %v375 = vld [vmem:[%s286 + $0x8] sm:$0xf]
        %v376 = vld [vmem:[%s286 + $0xc] sm:$0xf]
        %v377 = vld [vmem:[%s296] sm:$0xf]
        %v378 = vld [vmem:[%s296 + $0x4] sm:$0xf]
        %v379 = vld [vmem:[%s296 + $0x8] sm:$0xf]
        %v380 = vld [vmem:[%s296 + $0xc] sm:$0xf]
        %v381 = vld [vmem:[%s306] sm:$0xf]
        %v382 = vld [vmem:[%s306 + $0x4] sm:$0xf]
        %v383 = vld [vmem:[%s306 + $0x8] sm:$0xf]
        %v384 = vld [vmem:[%s306 + $0xc] sm:$0xf]
        %v385 = vld [vmem:[%s353] sm:$0x1]
        %v386 = vunpack.c.l.bf16 %v385
        %v387 = vperm.slane %v386, 0
        %vm388 = vcmask 130048
        %v390 = vsel %vm388, %v373, 0
        %v393 = vsel %vm388, %v377, 0
        %395 = vmatpush.bf16.xpose.msra.mxu0 0
        %396 = vmatpush.bf16.xpose.msra.mxu0 0
        %397 = vmatpush.bf16.xpose.msra.mxu0 0
        %398 = vmatpush.bf16.xpose.msra.mxu0 0
        %399 = vmatpush.bf16.xpose.msra.mxu0 0
        %400 = vmatpush.bf16.xpose.msra.mxu0 0
        %401 = vmatpush.bf16.xpose.msra.mxu0 0
        %402 = vmatpush.bf16.xpose.msra.mxu0 %v393
        %403 = vmatmul.bf16.gmra.mxu0 %v390
        %v404 = vpop.f32.mrf.mxu0
        %v405 = vadd.f32 %v387, %v404
        %v406 = vpop.f32.mrf.mxu0
        %407 = vdwg.mxu0
        %v409 = vsel %vm388, %v374, 0
        %v412 = vsel %vm388, %v378, 0
        %414 = vmatpush.bf16.xpose.msra.mxu0 0
        %415 = vmatpush.bf16.xpose.msra.mxu0 0
        %416 = vmatpush.bf16.xpose.msra.mxu0 0
        %417 = vmatpush.bf16.xpose.msra.mxu0 0
        %418 = vmatpush.bf16.xpose.msra.mxu0 0
        %419 = vmatpush.bf16.xpose.msra.mxu0 0
        %420 = vmatpush.bf16.xpose.msra.mxu0 0
        %421 = vmatpush.bf16.xpose.msra.mxu0 %v412
        %422 = vmatmul.bf16.gmra.mxu0 %v409
        %v423 = vpop.f32.mrf.mxu0
        %v424 = vadd.f32 %v387, %v423
        %v425 = vpop.f32.mrf.mxu0
        %426 = vdwg.mxu0
        %v428 = vsel %vm388, %v375, 0
        %v431 = vsel %vm388, %v379, 0
        %433 = vmatpush.bf16.xpose.msra.mxu0 0
        %434 = vmatpush.bf16.xpose.msra.mxu0 0
        %435 = vmatpush.bf16.xpose.msra.mxu0 0
        %436 = vmatpush.bf16.xpose.msra.mxu0 0
        %437 = vmatpush.bf16.xpose.msra.mxu0 0
        %438 = vmatpush.bf16.xpose.msra.mxu0 0
        %439 = vmatpush.bf16.xpose.msra.mxu0 0
        %440 = vmatpush.bf16.xpose.msra.mxu0 %v431
        %441 = vmatmul.bf16.gmra.mxu0 %v428
        %v442 = vpop.f32.mrf.mxu0
        %v443 = vadd.f32 %v387, %v442
        %v444 = vpop.f32.mrf.mxu0
        %445 = vdwg.mxu0
        %v447 = vsel %vm388, %v376, 0
        %v450 = vsel %vm388, %v380, 0
        %452 = vmatpush.bf16.xpose.msra.mxu0 0
        %453 = vmatpush.bf16.xpose.msra.mxu0 0
        %454 = vmatpush.bf16.xpose.msra.mxu0 0
        %455 = vmatpush.bf16.xpose.msra.mxu0 0
        %456 = vmatpush.bf16.xpose.msra.mxu0 0
        %457 = vmatpush.bf16.xpose.msra.mxu0 0
        %458 = vmatpush.bf16.xpose.msra.mxu0 0
        %459 = vmatpush.bf16.xpose.msra.mxu0 %v450
        %460 = vmatmul.bf16.gmra.mxu0 %v447
        %v461 = vpop.f32.mrf.mxu0
        %v462 = vadd.f32 %v387, %v461
        %v463 = vpop.f32.mrf.mxu0
        %464 = vdwg.mxu0
        %v465 = vld [vmem:[#allocation2] sm:$0xff]
        %v466 = vld [vmem:[#allocation2 + $0x8] sm:$0xff]
        %v467 = vld [vmem:[#allocation2 + $0x10] sm:$0xff]
        %v468 = vld [vmem:[#allocation2 + $0x18] sm:$0xff]
        %vm469 = vcmask 64512
        %v470 = vsel %vm469, %v405, -inf
        %471 = vmax.xlane.f32.xlu0 %v470
        %v472 = vpop.xlane.xlu0 %471
        %v473 = vsel %vm469, %v424, -inf
        %474 = vmax.xlane.f32.xlu0 %v473
        %v475 = vpop.xlane.xlu0 %474
        %v476 = vsel %vm469, %v443, -inf
        %477 = vmax.xlane.f32.xlu0 %v476
        %v478 = vpop.xlane.xlu0 %477
        %v479 = vsel %vm469, %v462, -inf
        %480 = vmax.xlane.f32.xlu0 %v479
        %v481 = vpop.xlane.xlu0 %480
        %v482 = vmax.f32 %v465, %v472
        %v483 = vmax.f32 %v466, %v475
        %v484 = vmax.f32 %v467, %v478
        %v485 = vmax.f32 %v468, %v481
        %v486 = vsub.f32 %v465, %v482
        %v487 = vsub.f32 %v466, %v483
        %v488 = vsub.f32 %v467, %v484
        %v489 = vsub.f32 %v468, %v485
        %v490 = vmul.f32 %v486, 1.442695
        %v491 = vpow.pop %v490
        %v492 = vmul.f32 %v487, 1.442695
        %v493 = vpow.pop %v492
        %v494 = vmul.f32 %v488, 1.442695
        %v495 = vpow.pop %v494
        %v496 = vmul.f32 %v489, 1.442695
        %v497 = vpow.pop %v496
        %499 = vset.pattern.permute.xlu0 0
        %500 = vperm.xlu0 %499, %v482
        %v501 = vpop.permute.xlu0 %500
        %504 = vset.pattern.permute.xlu0 0
        %505 = vperm.xlu0 %504, %v483
        %v506 = vpop.permute.xlu0 %505
        %509 = vset.pattern.permute.xlu0 0
        %510 = vperm.xlu0 %509, %v484
        %v511 = vpop.permute.xlu0 %510
        %514 = vset.pattern.permute.xlu0 0
        %515 = vperm.xlu0 %514, %v485
        %v516 = vpop.permute.xlu0 %515
        %v518 = vsub.f32 %v405, %v501
        %v519 = vsub.f32 %v424, %v506
        %v520 = vsub.f32 %v443, %v511
        %v521 = vsub.f32 %v462, %v516
        %v522 = vmul.f32 %v518, 1.442695
        %v523 = vpow.pop %v522
        %v524 = vmul.f32 %v519, 1.442695
        %v525 = vpow.pop %v524
        %v526 = vmul.f32 %v520, 1.442695
        %v527 = vpow.pop %v526
        %v528 = vmul.f32 %v521, 1.442695
        %v529 = vpow.pop %v528
        %v530 = vld [vmem:[#allocation3] sm:$0xff]
        %v531 = vld [vmem:[#allocation3 + $0x8] sm:$0xff]
        %v532 = vld [vmem:[#allocation3 + $0x10] sm:$0xff]
        %v533 = vld [vmem:[#allocation3 + $0x18] sm:$0xff]
        %v534 = vmul.f32 %v491, %v530
        %v535 = vmul.f32 %v493, %v531
        %v536 = vmul.f32 %v495, %v532
        %v537 = vmul.f32 %v497, %v533
        %v538 = vsel %vm469, %v523, 0.0
        %539 = vadd.xlane.f32.xlu0 %v538
        %v540 = vpop.xlane.xlu0 %539
        %v541 = vsel %vm469, %v525, 0.0
        %542 = vadd.xlane.f32.xlu0 %v541
        %v543 = vpop.xlane.xlu0 %542
        %v544 = vsel %vm469, %v527, 0.0
        %545 = vadd.xlane.f32.xlu0 %v544
        %v546 = vpop.xlane.xlu0 %545
        %v547 = vsel %vm469, %v529, 0.0
        %548 = vadd.xlane.f32.xlu0 %v547
        %v549 = vpop.xlane.xlu0 %548
        %v550 = vadd.f32 %v534, %v540
        %v551 = vadd.f32 %v535, %v543
        %v552 = vadd.f32 %v536, %v546
        %v553 = vadd.f32 %v537, %v549
        %vm554 = vcmask 7168
        %555 = vst.msk [vmem:[#allocation3] sm:$0xff] %vm554, %v550
        %556 = vst.msk [vmem:[#allocation3 + $0x8] sm:$0xff] %vm554, %v551
        %557 = vst.msk [vmem:[#allocation3 + $0x10] sm:$0xff] %vm554, %v552
        %558 = vst.msk [vmem:[#allocation3 + $0x18] sm:$0xff] %vm554, %v553
        %v559 = vld [vmem:[#allocation4] sm:$0xff]
        %v560 = vld [vmem:[#allocation4 + $0x8] sm:$0xff]
        %v561 = vld [vmem:[#allocation4 + $0x10] sm:$0xff]
        %v562 = vld [vmem:[#allocation4 + $0x18] sm:$0xff]
        %564 = vset.pattern.permute.xlu0 0
        %565 = vperm.xlu0 %564, %v491
        %v566 = vpop.permute.xlu0 %565
        %569 = vset.pattern.permute.xlu0 0
        %570 = vperm.xlu0 %569, %v493
        %v571 = vpop.permute.xlu0 %570
        %574 = vset.pattern.permute.xlu0 0
        %575 = vperm.xlu0 %574, %v495
        %v576 = vpop.permute.xlu0 %575
        %579 = vset.pattern.permute.xlu0 0
        %580 = vperm.xlu0 %579, %v497
        %v581 = vpop.permute.xlu0 %580
        %v583 = vmul.f32 %v566, %v559
        %v584 = vmul.f32 %v571, %v560
        %v585 = vmul.f32 %v576, %v561
        %v586 = vmul.f32 %v581, %v562
        %v587 = vpack.c.bf16 %v523, %v523
        %v588 = vpack.c.bf16 %v525, %v525
        %v589 = vpack.c.bf16 %v527, %v527
        %v590 = vpack.c.bf16 %v529, %v529
        %v592 = vsel %vm469, %v587, 0
        %vm594 = vcmask 1043456
        %v596 = vsel %vm594, %v381, 0
        %598 = vmatpush.bf16.msra.mxu0 0
        %599 = vmatpush.bf16.msra.mxu0 0
        %600 = vmatpush.bf16.msra.mxu0 0
        %601 = vmatpush.bf16.msra.mxu0 0
        %602 = vmatpush.bf16.msra.mxu0 0
        %603 = vmatpush.bf16.msra.mxu0 0
        %604 = vmatpush.bf16.msra.mxu0 0
        %605 = vmatpush.bf16.msra.mxu0 %v596
        %606 = vmatmul.bf16.gmra.mxu0 %v592
        %v607 = vpop.f32.mrf.mxu0
        %v608 = vadd.f32 0.0, %v607
        %v609 = vpop.f32.mrf.mxu0
        %610 = vdwg.mxu0
        %v612 = vsel %vm469, %v588, 0
        %v615 = vsel %vm594, %v382, 0
        %617 = vmatpush.bf16.msra.mxu0 0
        %618 = vmatpush.bf16.msra.mxu0 0
        %619 = vmatpush.bf16.msra.mxu0 0
        %620 = vmatpush.bf16.msra.mxu0 0
        %621 = vmatpush.bf16.msra.mxu0 0
        %622 = vmatpush.bf16.msra.mxu0 0
        %623 = vmatpush.bf16.msra.mxu0 0
        %624 = vmatpush.bf16.msra.mxu0 %v615
        %625 = vmatmul.bf16.gmra.mxu0 %v612
        %v626 = vpop.f32.mrf.mxu0
        %v627 = vadd.f32 0.0, %v626
        %v628 = vpop.f32.mrf.mxu0
        %629 = vdwg.mxu0
        %v631 = vsel %vm469, %v589, 0
        %v634 = vsel %vm594, %v383, 0
        %636 = vmatpush.bf16.msra.mxu0 0
        %637 = vmatpush.bf16.msra.mxu0 0
        %638 = vmatpush.bf16.msra.mxu0 0
        %639 = vmatpush.bf16.msra.mxu0 0
        %640 = vmatpush.bf16.msra.mxu0 0
        %641 = vmatpush.bf16.msra.mxu0 0
        %642 = vmatpush.bf16.msra.mxu0 0
        %643 = vmatpush.bf16.msra.mxu0 %v634
        %644 = vmatmul.bf16.gmra.mxu0 %v631
        %v645 = vpop.f32.mrf.mxu0
        %v646 = vadd.f32 0.0, %v645
        %v647 = vpop.f32.mrf.mxu0
        %648 = vdwg.mxu0
        %v650 = vsel %vm469, %v590, 0
        %v653 = vsel %vm594, %v384, 0
        %655 = vmatpush.bf16.msra.mxu0 0
        %656 = vmatpush.bf16.msra.mxu0 0
        %657 = vmatpush.bf16.msra.mxu0 0
        %658 = vmatpush.bf16.msra.mxu0 0
        %659 = vmatpush.bf16.msra.mxu0 0
        %660 = vmatpush.bf16.msra.mxu0 0
        %661 = vmatpush.bf16.msra.mxu0 0
        %662 = vmatpush.bf16.msra.mxu0 %v653
        %663 = vmatmul.bf16.gmra.mxu0 %v650
        %v664 = vpop.f32.mrf.mxu0
        %v665 = vadd.f32 0.0, %v664
        %v666 = vpop.f32.mrf.mxu0
        %667 = vdwg.mxu0
        %v668 = vadd.f32 %v583, %v608
        %v669 = vadd.f32 %v584, %v627
        %v670 = vadd.f32 %v585, %v646
        %v671 = vadd.f32 %v586, %v665
        %672 = vst.msk [vmem:[#allocation4] sm:$0xff] %vm388, %v668
        %673 = vst.msk [vmem:[#allocation4 + $0x8] sm:$0xff] %vm388, %v669
        %674 = vst.msk [vmem:[#allocation4 + $0x10] sm:$0xff] %vm388, %v670
        %675 = vst.msk [vmem:[#allocation4 + $0x18] sm:$0xff] %vm388, %v671
        %676 = vst.msk [vmem:[#allocation2] sm:$0xff] %vm554, %v482
        %677 = vst.msk [vmem:[#allocation2 + $0x8] sm:$0xff] %vm554, %v483
        %678 = vst.msk [vmem:[#allocation2 + $0x10] sm:$0xff] %vm554, %v484
        %679 = vst.msk [vmem:[#allocation2 + $0x18] sm:$0xff] %vm554, %v485
        // Predicated region
        $region53: #{tpu_custom_call.1} parent=35 // pred_check
          %p680 = pneg %p355
        $region54: #{tpu_custom_call.1} parent=35 // pred_check_branch
          %682 = sbr.rel (%p680) target = $region56
        $region55: #{tpu_custom_call.1} parent=35 // pred_region
          %v683 = vld [vmem:[#allocation3] sm:$0xff]
          %v684 = vld [vmem:[#allocation3 + $0x8] sm:$0xff]
          %v685 = vld [vmem:[#allocation3 + $0x10] sm:$0xff]
          %v686 = vld [vmem:[#allocation3 + $0x18] sm:$0xff]
          %v687 = vrcp.pop %v683
          %v688 = vmul.f32 %v683, %v687
          %v689 = vsub.f32 1.0, %v688
          %v690 = vmul.f32 %v687, %v689
          %v691 = vadd.f32 %v687, %v690
          %vm692 = vweird.f32 %v683
          %vm693 = vweird.f32 %v687
          %vm694 = vmor %vm692, %vm693
          %v695 = vsel %vm694, %v687, %v691
          %v696 = vand.u32 2147483647, %v683
          %vm697 = vcmp.eq.f32.partialorder %v696, 8.507059e+37
          %v698 = vand.u32 %v683, 2147483648
          %v699 = vor.u32 1.1754944e-38, %v698
          %v700 = vsel %vm697, %v699, %v695
          %v701 = vrcp.pop %v684
          %v702 = vmul.f32 %v684, %v701
          %v703 = vsub.f32 1.0, %v702
          %v704 = vmul.f32 %v701, %v703
          %v705 = vadd.f32 %v701, %v704
          %vm706 = vweird.f32 %v684
          %vm707 = vweird.f32 %v701
          %vm708 = vmor %vm706, %vm707
          %v709 = vsel %vm708, %v701, %v705
          %v710 = vand.u32 2147483647, %v684
          %vm711 = vcmp.eq.f32.partialorder %v710, 8.507059e+37
          %v712 = vand.u32 %v684, 2147483648
          %v713 = vor.u32 1.1754944e-38, %v712
          %v714 = vsel %vm711, %v713, %v709
          %v715 = vrcp.pop %v685
          %v716 = vmul.f32 %v685, %v715
          %v717 = vsub.f32 1.0, %v716
          %v718 = vmul.f32 %v715, %v717
          %v719 = vadd.f32 %v715, %v718
          %vm720 = vweird.f32 %v685
          %vm721 = vweird.f32 %v715
          %vm722 = vmor %vm720, %vm721
          %v723 = vsel %vm722, %v715, %v719
          %v724 = vand.u32 2147483647, %v685
          %vm725 = vcmp.eq.f32.partialorder %v724, 8.507059e+37
          %v726 = vand.u32 %v685, 2147483648
          %v727 = vor.u32 1.1754944e-38, %v726
          %v728 = vsel %vm725, %v727, %v723
          %v729 = vrcp.pop %v686
          %v730 = vmul.f32 %v686, %v729
          %v731 = vsub.f32 1.0, %v730
          %v732 = vmul.f32 %v729, %v731
          %v733 = vadd.f32 %v729, %v732
          %vm734 = vweird.f32 %v686
          %vm735 = vweird.f32 %v729
          %vm736 = vmor %vm734, %vm735
          %v737 = vsel %vm736, %v729, %v733
          %v738 = vand.u32 2147483647, %v686
          %vm739 = vcmp.eq.f32.partialorder %v738, 8.507059e+37
          %v740 = vand.u32 %v686, 2147483648
          %v741 = vor.u32 1.1754944e-38, %v740
          %v742 = vsel %vm739, %v741, %v737
          %v743 = vld [vmem:[#allocation4] sm:$0xff]
          %745 = vset.pattern.permute.xlu0 0
          %746 = vperm.xlu0 %745, %v700
          %v747 = vpop.permute.xlu0 %746
          %v749 = vmul.f32 %v743, %v747
          %750 = vst.msk [vmem:[%s347] sm:$0xff] %vm388, %v749
          %s751 = scalar_lea.vmem [#allocation4], 8
          %v752 = vld [vmem:[%s751] sm:$0xff]
          %754 = vset.pattern.permute.xlu0 0
          %755 = vperm.xlu0 %754, %v714
          %v756 = vpop.permute.xlu0 %755
          %v758 = vmul.f32 %v752, %v756
          %760 = vrot.lane.b32.xlu0 %v758, 16
          %v761 = vpop.permute.xlu0 %760
          %vm763 = vcmask 261248
          %764 = vst.msk [vmem:[%s347] sm:$0xff] %vm763, %v761
          %s765 = scalar_lea.vmem [#allocation4], 16
          %v766 = vld [vmem:[%s765] sm:$0xff]
          %768 = vset.pattern.permute.xlu0 0
          %769 = vperm.xlu0 %768, %v728
          %v770 = vpop.permute.xlu0 %769
          %v772 = vmul.f32 %v766, %v770
          %774 = vrot.lane.b32.xlu0 %v772, 32
          %v775 = vpop.permute.xlu0 %774
          %vm777 = vcmask 392448
          %778 = vst.msk [vmem:[%s347] sm:$0xff] %vm777, %v775
          %s779 = scalar_lea.vmem [#allocation4], 24
          %v780 = vld [vmem:[%s779] sm:$0xff]
          %782 = vset.pattern.permute.xlu0 0
          %783 = vperm.xlu0 %782, %v742
          %v784 = vpop.permute.xlu0 %783
          %v786 = vmul.f32 %v780, %v784
          %788 = vrot.lane.b32.xlu0 %v786, 48
          %v789 = vpop.permute.xlu0 %788
          %vm791 = vcmask 523648
          %792 = vst.msk [vmem:[%s347] sm:$0xff] %vm791, %v789
        $region56: #{tpu_custom_call.1} parent=35 // pred_fallthru
          _
        %s793 = sand.u32 %s165, 1
        %s794 = scalar_lea.sflag [#allocation7], %s793
        %s795 = sand.u32 %s165, 1
        %s796 = smul.addr %s795, 8
        %s797 = scalar_lea.vmem [#allocation11], %s796
        // Predicated region
        $region57: #{tpu_custom_call.1} parent=35 // pred_check
          %p798 = pneg %p175
        $region58: #{tpu_custom_call.1} parent=35 // pred_check_branch
          %800 = sbr.rel (%p798) target = $region60
        $region59: #{tpu_custom_call.1} parent=35 // pred_region
          %802 = vsyncadd %s794, 0
          %s803 = sadd.s32 %s30, %s29
          %s804 = smul.addr %s803, 8
          %s805 = scalar_lea.hbm %s4, %s804
          %s807 = sshll.u32 %s797, 4
          %s808 = int_to_ptr.vmem [resolvable:$true] %s807
          %s809 = sshll.u32 %s805, 4
          %s810 = int_to_ptr.hbm [resolvable:$true] %s809
          %812 = dma.vmem_to_hbm [thread:$0]  %s808, 128, %s810, %s794
        $region60: #{tpu_custom_call.1} parent=35 // pred_fallthru
          _
      $region36: #{tpu_custom_call.1} parent=5 // pred_fallthru
        _
      %p813 = scmp.le.s32.totalorder 2, %s19
      // Predicated region
      $region61: #{tpu_custom_call.1} parent=5 // pred_check
        %p814 = pneg %p813
      $region62: #{tpu_custom_call.1} parent=5 // pred_check_branch
        %816 = sbr.rel (%p814) target = $region64
      $region63: #{tpu_custom_call.1} parent=5 // pred_region
        %s817 = ssub.s32 %s19, 2
        // Predicated region
        $region65: #{tpu_custom_call.1} parent=63 // pred_check
          %p818 = pneg %p181
        $region66: #{tpu_custom_call.1} parent=63 // pred_check_branch
          %820 = sbr.rel (%p818) target = $region68
        $region67: #{tpu_custom_call.1} parent=63 // pred_region
          %s821 = sand.u32 %s166, 1
          %s822 = scalar_lea.sflag [#allocation7], %s821
          %s823 = sand.u32 %s166, 1
          %s824 = smul.addr %s823, 8
          %s825 = scalar_lea.vmem [#allocation11], %s824
          %827 = dma.done %s822, 128
        $region68: #{tpu_custom_call.1} parent=63 // pred_fallthru
          _
      $region64: #{tpu_custom_call.1} parent=5 // pred_fallthru
        _
    $region6: #{tpu_custom_call.1} parent=1 // loop_footer
      %s23 = sadd.s32 1, %s19
    $region7: #{tpu_custom_call.1} parent=1 // loop_footer_branch
      %18 = sbr.rel target = $region3
    $region8: #{tpu_custom_call.1} parent=1 // loop_exit
      _
    %828 = vsyncpa [#allocation6], 1
    %s829 = scalar_lea.sflag [#allocation6], 1
    %830 = vsyncpa %s829, 1
    %831 = vsyncpa [#allocation9], 1
    %s832 = scalar_lea.sflag [#allocation9], 1
    %833 = vsyncpa %s832, 1
    %834 = vsyncpa [#allocation7], 1
    %s835 = scalar_lea.sflag [#allocation7], 1
    %836 = vsyncpa %s835, 1

</llo_original>
